<compile_context>
chip_gen: v7x
topology: tpu7x:2x2x1
jax: 0.10.0
libtpu: 0.0.40
codegen_flags: <defaults>
</compile_context>

<pallas_src>
import jax
import jax.numpy as jnp
from jax.experimental import pallas as pl
from jax.experimental.pallas import tpu as pltpu

ACT_TYPE = "relu"  # one of: sigmoid / tanh / relu / elu


def _act(v):
    if ACT_TYPE == "sigmoid":
        return jax.nn.sigmoid(v)
    if ACT_TYPE == "tanh":
        return jnp.tanh(v)
    if ACT_TYPE == "relu":
        return jnp.maximum(v, 0.0)
    if ACT_TYPE == "elu":
        return jnp.where(v > 0, v, jnp.expm1(v))
    raise RuntimeError("unknown act_type {0}".format(ACT_TYPE))


def _round_up(v, m):
    return ((v + m - 1) // m) * m


# ----------------------------------------------------------------------------
# Kernel
# ----------------------------------------------------------------------------
def _m3tn1_kernel(x_ref, w1_ref, w2_ref, w3_ref, w4_ref, wh_ref,
                  b1_ref, b2_ref, b3_ref, b4_ref, bh_ref, out_ref):
    f32 = jnp.float32
    bf16 = jnp.bfloat16

    x = x_ref[...]  # already bf16 (cast in the wrapper to halve the x stream)

    # Fused tower: both c_* and u_* branches advance together through the
    # block-diagonal weights (5 bf16 MXU dots, f32 accumulation).
    h = _act(jnp.dot(x, w1_ref[...], preferred_element_type=f32) + b1_ref[...])
    h = _act(jnp.dot(h.astype(bf16), w2_ref[...],
                     preferred_element_type=f32) + b2_ref[...])
    h = _act(jnp.dot(h.astype(bf16), w3_ref[...],
                     preferred_element_type=f32) + b3_ref[...])
    h = _act(jnp.dot(h.astype(bf16), w4_ref[...],
                     preferred_element_type=f32) + b4_ref[...])
    # TODO(synk): is_self=True branch (c_fc5 / u_fc5) skipped — the PyTorch
    # module would fail to construct it (float layer dim), so it is not modeled.

    # Fused head: cols = [c_logit, c_logit, c_tau, t_logit, t_logit, u_tau, 0, 0]
    head = (jnp.dot(h.astype(bf16), wh_ref[...], preferred_element_type=f32)
            + bh_ref[...])

    # Sigmoid in place on the duplicated logit columns (1 -> c_prob,
    # 4 -> t_prob); f32 on the EUP.
    col = jax.lax.broadcasted_iota(jnp.int32, head.shape, 1)
    head = jnp.where((col == 1) | (col == 4), jax.nn.sigmoid(head), head)

    # Lane-dense transposed store: out block is (8, tile_b), unmasked wide vst.
    out_ref[...] = head.T


# ----------------------------------------------------------------------------
# Wrapper
# ----------------------------------------------------------------------------
def m3tn1_forward(x, packed_params, *, max_tile_b=4096):
    """packed_params: (W1..W4, Whead [bf16], b1..b4, bh [f32]) from pack_m3tn1_params."""
    w1, w2, w3, w4, wh, b1, b2, b3, b4, bh = packed_params
    batch, input_dim = x.shape
    n_out = wh.shape[1]  # 8

    x_bf16 = x.astype(jnp.bfloat16)

    # ------------------------------------------------------------------ tile
    max_tile_b = max(128, (max_tile_b // 128) * 128)  # keep 128-aligned
    if batch <= 256:
        # Single grid step: blocks equal the full array dims, no alignment
        # constraints, no per-step loop overhead.
        tile_b = batch
    else:
        # >= 2 grid steps so both v7x TensorCores get work; 128-aligned so the
        # lane-dense (8, tile_b) output block and the bf16 x block tile cleanly.
        tile_b = min(max_tile_b, _round_up(pl.cdiv(batch, 2), 128))
    grid = (pl.cdiv(batch, tile_b),)

    # VMEM budget: ~2-4 KiB / row (bf16 x + f32 intermediates + transposed out,
    # double-buffered) plus fixed headroom; clamp below v7x's 64 MiB physical.
    est_vmem = tile_b * 4 * 1024 + (4 << 20)
    vmem_limit = int(min(max(est_vmem, 32 << 20), 56 << 20))

    # Advisory cost so XLA overlaps this small call with surrounding ops.
    flops = 2 * batch * (w1.shape[0] * w1.shape[1] + w2.shape[0] * w2.shape[1]
                         + w3.shape[0] * w3.shape[1] + w4.shape[0] * w4.shape[1]
                         + wh.shape[0] * wh.shape[1])
    bytes_accessed = (int(x_bf16.size) * 2 + batch * n_out * 4
                      + sum(int(w.size) * 2 for w in (w1, w2, w3, w4, wh))
                      + sum(int(b.size) * 4 for b in (b1, b2, b3, b4, bh)))
    cost = pl.CostEstimate(flops=int(flops), transcendentals=2 * batch,
                           bytes_accessed=int(bytes_accessed))

    def _rep(shape):
        # Full-array block, same block at every grid step (loaded once).
        return pl.BlockSpec(shape, lambda i: (0, 0))

    out_t = pl.pallas_call(
        _m3tn1_kernel,
        out_shape=jax.ShapeDtypeStruct((n_out, batch), jnp.float32),
        grid=grid,
        in_specs=[
            pl.BlockSpec((tile_b, input_dim), lambda i: (i, 0)),   # x (bf16)
            _rep(w1.shape), _rep(w2.shape), _rep(w3.shape), _rep(w4.shape),
            _rep(wh.shape),
            _rep(b1.shape), _rep(b2.shape), _rep(b3.shape), _rep(b4.shape),
            _rep(bh.shape),
        ],
        out_specs=pl.BlockSpec((n_out, tile_b), lambda i: (0, i)),
        compiler_params=pltpu.CompilerParams(
            dimension_semantics=("parallel",),
            vmem_limit_bytes=vmem_limit),
        cost_estimate=cost,
    )(x_bf16, w1, w2, w3, w4, wh, b1, b2, b3, b4, bh)

    c_logit = out_t[0, :][:, None]
    c_prob = out_t[1, :][:, None]
    c_tau = out_t[2, :][:, None]
    t_logit = out_t[3, :][:, None]
    t_prob = out_t[4, :][:, None]
    u_tau = out_t[5, :][:, None]
    return c_logit, c_prob, c_tau, t_logit, t_prob, u_tau


# ----------------------------------------------------------------------------
# Parameter init (matches PyTorch nn.Linear defaults) and packing
# ----------------------------------------------------------------------------
def _init_linear(key, fan_in, fan_out):
    """PyTorch nn.Linear default init: U(-1/sqrt(fan_in), 1/sqrt(fan_in)).

    Weight returned as (fan_in, fan_out) (transposed vs. PyTorch storage).
    Bias returned as (1, fan_out).
    """
    kw, kb = jax.random.split(key)
    bound = 1.0 / jnp.sqrt(fan_in)
    w = jax.random.uniform(kw, (fan_in, fan_out), jnp.float32,
                           minval=-bound, maxval=bound)
    b = jax.random.uniform(kb, (1, fan_out), jnp.float32,
                           minval=-bound, maxval=bound)
    return w, b


def init_m3tn1_params(key, input_dim, h_dim):
    """Per-layer params, 12 (w, b) pairs: c tower then u tower."""
    layer_dims = [
        (input_dim, h_dim),        # fc1
        (h_dim, h_dim),            # fc2
        (h_dim, h_dim // 2),       # fc3
        (h_dim // 2, h_dim // 4),  # fc4
        (h_dim // 4, 1),           # logit head
        (h_dim // 4, 1),           # tau head
    ]
    params = []
    keys = jax.random.split(key, 2 * len(layer_dims))
    k_idx = 0
    for _tower in ("c", "u"):
        for fan_in, fan_out in layer_dims:
            w, b = _init_linear(keys[k_idx], fan_in, fan_out)
            k_idx += 1
            params.append(w)
            params.append(b)
    return tuple(params)


def pack_m3tn1_params(params, input_dim, h_dim):
    """One-time wrapper-side fusion of the two towers into block-diag weights.

    Weights are stored bf16 (MXU operands); biases stay f32 at exact widths.
    """
    (cw1, cb1, cw2, cb2, cw3, cb3, cw4, cb4, clw, clb, ctw, ctb,
     uw1, ub1, uw2, ub2, uw3, ub3, uw4, ub4, tlw, tlb, utw, utb) = params

    def block_diag(a, b):
        return jnp.block([
            [a, jnp.zeros((a.shape[0], b.shape[1]), a.dtype)],
            [jnp.zeros((b.shape[0], a.shape[1]), b.dtype), b],
        ])

    w1 = jnp.concatenate([cw1, uw1], axis=1)   # (input_dim, 2h)
    w2 = block_diag(cw2, uw2)                  # (2h, 2h)
    w3 = block_diag(cw3, uw3)                  # (2h, h)
    w4 = block_diag(cw4, uw4)                  # (h, h//2)

    q = h_dim // 4
    wh = jnp.zeros((2 * q, 8), jnp.float32)
    wh = wh.at[0:q, 0].set(clw[:, 0])          # c_logit
    wh = wh.at[0:q, 1].set(clw[:, 0])          # c_logit (-> sigmoid -> c_prob)
    wh = wh.at[0:q, 2].set(ctw[:, 0])          # c_tau
    wh = wh.at[q:2 * q, 3].set(tlw[:, 0])      # t_logit
    wh = wh.at[q:2 * q, 4].set(tlw[:, 0])      # t_logit (-> sigmoid -> t_prob)
    wh = wh.at[q:2 * q, 5].set(utw[:, 0])      # u_tau

    b1 = jnp.concatenate([cb1, ub1], axis=1)   # (1, 2h)
    b2 = jnp.concatenate([cb2, ub2], axis=1)   # (1, 2h)
    b3 = jnp.concatenate([cb3, ub3], axis=1)   # (1, h)
    b4 = jnp.concatenate([cb4, ub4], axis=1)   # (1, h//2)
    bh = jnp.zeros((1, 8), jnp.float32)
    bh = bh.at[0, 0].set(clb[0, 0]).at[0, 1].set(clb[0, 0]).at[0, 2].set(ctb[0, 0])
    bh = bh.at[0, 3].set(tlb[0, 0]).at[0, 4].set(tlb[0, 0]).at[0, 5].set(utb[0, 0])

    bf16 = jnp.bfloat16
    return (w1.astype(bf16), w2.astype(bf16), w3.astype(bf16),
            w4.astype(bf16), wh.astype(bf16),
            b1, b2, b3, b4, bh)


# ----------------------------------------------------------------------------
# Pure-JAX f32 reference (per-layer params) for validation
# ----------------------------------------------------------------------------
def reference_forward(x, params):
    (cw1, cb1, cw2, cb2, cw3, cb3, cw4, cb4, clw, clb, ctw, ctb,
     uw1, ub1, uw2, ub2, uw3, ub3, uw4, ub4, tlw, tlb, utw, utb) = params
    c = _act(x @ cw1 + cb1)
    c = _act(c @ cw2 + cb2)
    c = _act(c @ cw3 + cb3)
    c = _act(c @ cw4 + cb4)
    c_logit = c @ clw + clb
    c_tau = c @ ctw + ctb
    u = _act(x @ uw1 + ub1)
    u = _act(u @ uw2 + ub2)
    u = _act(u @ uw3 + ub3)
    u = _act(u @ uw4 + ub4)
    t_logit = u @ tlw + tlb
    u_tau = u @ utw + utb
    return (c_logit, jax.nn.sigmoid(c_logit), c_tau,
            t_logit, jax.nn.sigmoid(t_logit), u_tau)


if __name__ == "__main__":
    batch = 8
    input_dim = 32
    h_dim = 32

    root = jax.random.PRNGKey(0)
    k_x, k_p = jax.random.split(root)

    x = jax.random.normal(k_x, (batch, input_dim), dtype=jnp.float32)
    raw_params = init_m3tn1_params(k_p, input_dim, h_dim)
    packed = pack_m3tn1_params(raw_params, input_dim, h_dim)

    outs = m3tn1_forward(x, packed)
    outs = jax.block_until_ready(outs)

    # bf16 MXU operands -> loosened tolerance vs. the pure-f32 reference.
    refs = reference_forward(x, raw_params)
    names = ("c_logit", "c_prob", "c_tau", "t_logit", "t_prob", "u_tau")
    for name, o, r in zip(names, outs, refs):
        assert o.shape == (batch, 1), (name, o.shape)
        assert jnp.allclose(o, r, atol=3e-2, rtol=3e-2), (
            name, jnp.max(jnp.abs(o - r)))

    print("KERNEL_OK")
</pallas_src>

<mosaic_0001>
module attributes {stable_mosaic.version = 11 : i64} {
  func.func @_m3tn1_kernel(%arg0: i32, %arg1: memref<8x32xbf16, #tpu.memory_space<vmem>>, %arg2: memref<32x64xbf16, #tpu.memory_space<vmem>>, %arg3: memref<64x64xbf16, #tpu.memory_space<vmem>>, %arg4: memref<64x32xbf16, #tpu.memory_space<vmem>>, %arg5: memref<32x16xbf16, #tpu.memory_space<vmem>>, %arg6: memref<16x8xbf16, #tpu.memory_space<vmem>>, %arg7: memref<1x64xf32, #tpu.memory_space<vmem>>, %arg8: memref<1x64xf32, #tpu.memory_space<vmem>>, %arg9: memref<1x32xf32, #tpu.memory_space<vmem>>, %arg10: memref<1x16xf32, #tpu.memory_space<vmem>>, %arg11: memref<1x8xf32, #tpu.memory_space<vmem>>, %arg12: memref<8x8xf32, #tpu.memory_space<vmem>>) attributes {dimension_semantics = [#tpu.dimension_semantics<parallel>], iteration_bounds = array<i64: 1>, scalar_prefetch = 0 : i64, scratch_operands = 0 : i64, tpu.core_type = #tpu.core_type<tc>, window_params = [{transform_indices = @transform_0, window_bounds = array<i64: 8, 32>}, {pipeline_mode = #tpu.pipeline_mode<synchronous>, transform_indices = @transform_1, window_bounds = array<i64: 32, 64>}, {pipeline_mode = #tpu.pipeline_mode<synchronous>, transform_indices = @transform_2, window_bounds = array<i64: 64, 64>}, {pipeline_mode = #tpu.pipeline_mode<synchronous>, transform_indices = @transform_3, window_bounds = array<i64: 64, 32>}, {pipeline_mode = #tpu.pipeline_mode<synchronous>, transform_indices = @transform_4, window_bounds = array<i64: 32, 16>}, {pipeline_mode = #tpu.pipeline_mode<synchronous>, transform_indices = @transform_5, window_bounds = array<i64: 16, 8>}, {pipeline_mode = #tpu.pipeline_mode<synchronous>, transform_indices = @transform_6, window_bounds = array<i64: 1, 64>}, {pipeline_mode = #tpu.pipeline_mode<synchronous>, transform_indices = @transform_7, window_bounds = array<i64: 1, 64>}, {pipeline_mode = #tpu.pipeline_mode<synchronous>, transform_indices = @transform_8, window_bounds = array<i64: 1, 32>}, {pipeline_mode = #tpu.pipeline_mode<synchronous>, transform_indices = @transform_9, window_bounds = array<i64: 1, 16>}, {pipeline_mode = #tpu.pipeline_mode<synchronous>, transform_indices = @transform_10, window_bounds = array<i64: 1, 8>}, {transform_indices = @transform_11, window_bounds = array<i64: 8, 8>}]} {
    %c0 = arith.constant 0 : index
    %c0_0 = arith.constant 0 : index
    %0 = vector.load %arg1[%c0, %c0_0] : memref<8x32xbf16, #tpu.memory_space<vmem>>, vector<8x32xbf16>
    %c0_1 = arith.constant 0 : index
    %c0_2 = arith.constant 0 : index
    %1 = vector.load %arg2[%c0_1, %c0_2] : memref<32x64xbf16, #tpu.memory_space<vmem>>, vector<32x64xbf16>
    %cst = arith.constant dense<0.000000e+00> : vector<8x64xf32>
    %2 = tpu.matmul %0, %1, %cst {dimension_numbers = #tpu.dot_dimension_numbers<[1], [0], [0], [1], [0, 0, 1, 1], [], []>} : vector<8x32xbf16>, vector<32x64xbf16>, vector<8x64xf32> -> vector<8x64xf32>
    %c0_3 = arith.constant 0 : index
    %c0_4 = arith.constant 0 : index
    %3 = vector.load %arg7[%c0_3, %c0_4] : memref<1x64xf32, #tpu.memory_space<vmem>>, vector<1x64xf32>
    %4 = vector.broadcast %3 : vector<1x64xf32> to vector<8x64xf32>
    %5 = arith.addf %2, %4 : vector<8x64xf32>
    %cst_5 = arith.constant 0.000000e+00 : f32
    %6 = vector.broadcast %cst_5 : f32 to vector<8x64xf32>
    %7 = arith.maximumf %5, %6 : vector<8x64xf32>
    %8 = arith.truncf %7 : vector<8x64xf32> to vector<8x64xbf16>
    %c0_6 = arith.constant 0 : index
    %c0_7 = arith.constant 0 : index
    %9 = vector.load %arg3[%c0_6, %c0_7] : memref<64x64xbf16, #tpu.memory_space<vmem>>, vector<64x64xbf16>
    %cst_8 = arith.constant dense<0.000000e+00> : vector<8x64xf32>
    %10 = tpu.matmul %8, %9, %cst_8 {dimension_numbers = #tpu.dot_dimension_numbers<[1], [0], [0], [1], [0, 0, 1, 1], [], []>} : vector<8x64xbf16>, vector<64x64xbf16>, vector<8x64xf32> -> vector<8x64xf32>
    %c0_9 = arith.constant 0 : index
    %c0_10 = arith.constant 0 : index
    %11 = vector.load %arg8[%c0_9, %c0_10] : memref<1x64xf32, #tpu.memory_space<vmem>>, vector<1x64xf32>
    %12 = vector.broadcast %11 : vector<1x64xf32> to vector<8x64xf32>
    %13 = arith.addf %10, %12 : vector<8x64xf32>
    %cst_11 = arith.constant 0.000000e+00 : f32
    %14 = vector.broadcast %cst_11 : f32 to vector<8x64xf32>
    %15 = arith.maximumf %13, %14 : vector<8x64xf32>
    %16 = arith.truncf %15 : vector<8x64xf32> to vector<8x64xbf16>
    %c0_12 = arith.constant 0 : index
    %c0_13 = arith.constant 0 : index
    %17 = vector.load %arg4[%c0_12, %c0_13] : memref<64x32xbf16, #tpu.memory_space<vmem>>, vector<64x32xbf16>
    %cst_14 = arith.constant dense<0.000000e+00> : vector<8x32xf32>
    %18 = tpu.matmul %16, %17, %cst_14 {dimension_numbers = #tpu.dot_dimension_numbers<[1], [0], [0], [1], [0, 0, 1, 1], [], []>} : vector<8x64xbf16>, vector<64x32xbf16>, vector<8x32xf32> -> vector<8x32xf32>
    %c0_15 = arith.constant 0 : index
    %c0_16 = arith.constant 0 : index
    %19 = vector.load %arg9[%c0_15, %c0_16] : memref<1x32xf32, #tpu.memory_space<vmem>>, vector<1x32xf32>
    %20 = vector.broadcast %19 : vector<1x32xf32> to vector<8x32xf32>
    %21 = arith.addf %18, %20 : vector<8x32xf32>
    %cst_17 = arith.constant 0.000000e+00 : f32
    %22 = vector.broadcast %cst_17 : f32 to vector<8x32xf32>
    %23 = arith.maximumf %21, %22 : vector<8x32xf32>
    %24 = arith.truncf %23 : vector<8x32xf32> to vector<8x32xbf16>
    %c0_18 = arith.constant 0 : index
    %c0_19 = arith.constant 0 : index
    %25 = vector.load %arg5[%c0_18, %c0_19] : memref<32x16xbf16, #tpu.memory_space<vmem>>, vector<32x16xbf16>
    %cst_20 = arith.constant dense<0.000000e+00> : vector<8x16xf32>
    %26 = tpu.matmul %24, %25, %cst_20 {dimension_numbers = #tpu.dot_dimension_numbers<[1], [0], [0], [1], [0, 0, 1, 1], [], []>} : vector<8x32xbf16>, vector<32x16xbf16>, vector<8x16xf32> -> vector<8x16xf32>
    %c0_21 = arith.constant 0 : index
    %c0_22 = arith.constant 0 : index
    %27 = vector.load %arg10[%c0_21, %c0_22] : memref<1x16xf32, #tpu.memory_space<vmem>>, vector<1x16xf32>
    %28 = vector.broadcast %27 : vector<1x16xf32> to vector<8x16xf32>
    %29 = arith.addf %26, %28 : vector<8x16xf32>
    %cst_23 = arith.constant 0.000000e+00 : f32
    %30 = vector.broadcast %cst_23 : f32 to vector<8x16xf32>
    %31 = arith.maximumf %29, %30 : vector<8x16xf32>
    %32 = arith.truncf %31 : vector<8x16xf32> to vector<8x16xbf16>
    %c0_24 = arith.constant 0 : index
    %c0_25 = arith.constant 0 : index
    %33 = vector.load %arg6[%c0_24, %c0_25] : memref<16x8xbf16, #tpu.memory_space<vmem>>, vector<16x8xbf16>
    %cst_26 = arith.constant dense<0.000000e+00> : vector<8x8xf32>
    %34 = tpu.matmul %32, %33, %cst_26 {dimension_numbers = #tpu.dot_dimension_numbers<[1], [0], [0], [1], [0, 0, 1, 1], [], []>} : vector<8x16xbf16>, vector<16x8xbf16>, vector<8x8xf32> -> vector<8x8xf32>
    %c0_27 = arith.constant 0 : index
    %c0_28 = arith.constant 0 : index
    %35 = vector.load %arg11[%c0_27, %c0_28] : memref<1x8xf32, #tpu.memory_space<vmem>>, vector<1x8xf32>
    %36 = vector.broadcast %35 : vector<1x8xf32> to vector<8x8xf32>
    %37 = arith.addf %34, %36 : vector<8x8xf32>
    %38 = tpu.iota {dimensions = array<i32: 1>} : vector<8x8xi32>
    %c1_i32 = arith.constant 1 : i32
    %39 = vector.broadcast %c1_i32 : i32 to vector<8x8xi32>
    %40 = arith.cmpi eq, %38, %39 : vector<8x8xi32>
    %c4_i32 = arith.constant 4 : i32
    %41 = vector.broadcast %c4_i32 : i32 to vector<8x8xi32>
    %42 = arith.cmpi eq, %38, %41 : vector<8x8xi32>
    %43 = arith.ori %40, %42 : vector<8x8xi1>
    %44 = arith.negf %37 : vector<8x8xf32>
    %45 = math.exp %44 : vector<8x8xf32>
    %cst_29 = arith.constant 1.000000e+00 : f32
    %46 = vector.broadcast %cst_29 : f32 to vector<8x8xf32>
    %47 = arith.addf %46, %45 : vector<8x8xf32>
    %48 = arith.divf %46, %47 : vector<8x8xf32>
    %49 = arith.select %43, %48, %37 : vector<8x8xi1>, vector<8x8xf32>
    %50 = tpu.transpose %49, [1, 0] : vector<8x8xf32> -> vector<8x8xf32>
    %c0_30 = arith.constant 0 : index
    %c0_31 = arith.constant 0 : index
    %51 = vector.load %arg12[%c0_30, %c0_31] : memref<8x8xf32, #tpu.memory_space<vmem>>, vector<8x8xf32>
    tpu.vector_store %arg12[%c0_30, %c0_31], %50 {strides = array<i32>} : memref<8x8xf32, #tpu.memory_space<vmem>>, vector<8x8xf32>,
    return
  }
  func.func @transform_0(%arg0: i32) -> (i32, i32) {
    %c0_i32 = arith.constant 0 : i32
    %c0_i32_0 = arith.constant 0 : i32
    return %arg0, %c0_i32 : i32, i32
  }
  func.func @transform_1(%arg0: i32) -> (i32, i32) {
    %c0_i32 = arith.constant 0 : i32
    %c0_i32_0 = arith.constant 0 : i32
    %c0_i32_1 = arith.constant 0 : i32
    return %c0_i32, %c0_i32_0 : i32, i32
  }
  func.func @transform_2(%arg0: i32) -> (i32, i32) {
    %c0_i32 = arith.constant 0 : i32
    %c0_i32_0 = arith.constant 0 : i32
    %c0_i32_1 = arith.constant 0 : i32
    return %c0_i32, %c0_i32_0 : i32, i32
  }
  func.func @transform_3(%arg0: i32) -> (i32, i32) {
    %c0_i32 = arith.constant 0 : i32
    %c0_i32_0 = arith.constant 0 : i32
    %c0_i32_1 = arith.constant 0 : i32
    return %c0_i32, %c0_i32_0 : i32, i32
  }
  func.func @transform_4(%arg0: i32) -> (i32, i32) {
    %c0_i32 = arith.constant 0 : i32
    %c0_i32_0 = arith.constant 0 : i32
    %c0_i32_1 = arith.constant 0 : i32
    return %c0_i32, %c0_i32_0 : i32, i32
  }
  func.func @transform_5(%arg0: i32) -> (i32, i32) {
    %c0_i32 = arith.constant 0 : i32
    %c0_i32_0 = arith.constant 0 : i32
    %c0_i32_1 = arith.constant 0 : i32
    return %c0_i32, %c0_i32_0 : i32, i32
  }
  func.func @transform_6(%arg0: i32) -> (i32, i32) {
    %c0_i32 = arith.constant 0 : i32
    %c0_i32_0 = arith.constant 0 : i32
    %c0_i32_1 = arith.constant 0 : i32
    return %c0_i32, %c0_i32_0 : i32, i32
  }
  func.func @transform_7(%arg0: i32) -> (i32, i32) {
    %c0_i32 = arith.constant 0 : i32
    %c0_i32_0 = arith.constant 0 : i32
    %c0_i32_1 = arith.constant 0 : i32
    return %c0_i32, %c0_i32_0 : i32, i32
  }
  func.func @transform_8(%arg0: i32) -> (i32, i32) {
    %c0_i32 = arith.constant 0 : i32
    %c0_i32_0 = arith.constant 0 : i32
    %c0_i32_1 = arith.constant 0 : i32
    return %c0_i32, %c0_i32_0 : i32, i32
  }
  func.func @transform_9(%arg0: i32) -> (i32, i32) {
    %c0_i32 = arith.constant 0 : i32
    %c0_i32_0 = arith.constant 0 : i32
    %c0_i32_1 = arith.constant 0 : i32
    return %c0_i32, %c0_i32_0 : i32, i32
  }
  func.func @transform_10(%arg0: i32) -> (i32, i32) {
    %c0_i32 = arith.constant 0 : i32
    %c0_i32_0 = arith.constant 0 : i32
    %c0_i32_1 = arith.constant 0 : i32
    return %c0_i32, %c0_i32_0 : i32, i32
  }
  func.func @transform_11(%arg0: i32) -> (i32, i32) {
    %c0_i32 = arith.constant 0 : i32
    %c0_i32_0 = arith.constant 0 : i32
    return %c0_i32, %arg0 : i32, i32
  }
}

</mosaic_0001>

<llo_original>
// kernel: tpu_custom_call.1
$region0: #{tpu_custom_call.1}
  #allocation0 [shape = 'u32[]', space=smem, size = 0x4, offset = 0x4, fixed_abs, tag = 'smem constant byte address 0x4 - core index']
  #allocation1 [shape = 'u32[144,128]{1,0:T(1,128)}', space=vmem, size = 0x12000, scoped, tag = 'internal scratch']
  %s0 = inlined_call_operand.vmem [shape: bf16[8,32], index: 0, kind: input, shape index: {}]
  %s1 = inlined_call_operand.vmem [shape: bf16[32,64], index: 1, kind: input, shape index: {}]
  %s2 = inlined_call_operand.vmem [shape: bf16[64,64], index: 2, kind: input, shape index: {}]
  %s3 = inlined_call_operand.vmem [shape: bf16[64,32], index: 3, kind: input, shape index: {}]
  %s4 = inlined_call_operand.vmem [shape: bf16[32,16], index: 4, kind: input, shape index: {}]
  %s5 = inlined_call_operand.vmem [shape: bf16[16,8], index: 5, kind: input, shape index: {}]
  %s6 = inlined_call_operand.vmem [shape: f32[1,64], index: 6, kind: input, shape index: {}]
  %s7 = inlined_call_operand.vmem [shape: f32[1,64], index: 7, kind: input, shape index: {}]
  %s8 = inlined_call_operand.vmem [shape: f32[1,32], index: 8, kind: input, shape index: {}]
  %s9 = inlined_call_operand.vmem [shape: f32[1,16], index: 9, kind: input, shape index: {}]
  %s10 = inlined_call_operand.vmem [shape: f32[1,8], index: 10, kind: input, shape index: {}]
  %s11 = inlined_call_operand.hbm [shape: f32[8,8], index: 11, kind: output, shape index: {}]
  %s12 = sld [smem:[#allocation0]]
  $region54: #{tpu_custom_call.1} parent=0
    _
  %s14 = ssub.s32 1, %s12
  %s15 = scalar_select 0, %s14, %s12
  $region1: #{tpu_custom_call.1} parent=0
    #allocation2 [shape = 'u8[4096]{0}', space=vmem, size = 0x1000, scoped, tag = 'output window, operand 0, single buffered']
    #allocation3 [shape = 's32[1]{0}', space=sflag, size = 0x4, scoped, tag = 'scoped memory for tpu_custom_call.1']
    %16 = vsyncpa [#allocation3], 0
    // Predicated region
    $region2: #{tpu_custom_call.1} parent=1 // pred_check
      _
    $region3: #{tpu_custom_call.1} parent=1 // pred_check_branch
      %18 = sbr.rel (0) target = $region5
    $region4: #{tpu_custom_call.1} parent=1 // pred_region
      _
    $region5: #{tpu_custom_call.1} parent=1 // pred_fallthru
      _
    // Predicated region
    $region6: #{tpu_custom_call.1} parent=1 // pred_check
      _
    $region7: #{tpu_custom_call.1} parent=1 // pred_check_branch
      %20 = sbr.rel (0) target = $region9
    $region8: #{tpu_custom_call.1} parent=1 // pred_region
      _
    $region9: #{tpu_custom_call.1} parent=1 // pred_fallthru
      _
    // Predicated region
    $region10: #{tpu_custom_call.1} parent=1 // pred_check
      _
    $region11: #{tpu_custom_call.1} parent=1 // pred_check_branch
      %22 = sbr.rel (0) target = $region13
    $region12: #{tpu_custom_call.1} parent=1 // pred_region
      _
    $region13: #{tpu_custom_call.1} parent=1 // pred_fallthru
      _
    // Predicated region
    $region14: #{tpu_custom_call.1} parent=1 // pred_check
      _
    $region15: #{tpu_custom_call.1} parent=1 // pred_check_branch
      %24 = sbr.rel (0) target = $region17
    $region16: #{tpu_custom_call.1} parent=1 // pred_region
      _
    $region17: #{tpu_custom_call.1} parent=1 // pred_fallthru
      _
    // Predicated region
    $region18: #{tpu_custom_call.1} parent=1 // pred_check
      _
    $region19: #{tpu_custom_call.1} parent=1 // pred_check_branch
      %26 = sbr.rel (0) target = $region21
    $region20: #{tpu_custom_call.1} parent=1 // pred_region
      _
    $region21: #{tpu_custom_call.1} parent=1 // pred_fallthru
      _
    // Predicated region
    $region22: #{tpu_custom_call.1} parent=1 // pred_check
      _
    $region23: #{tpu_custom_call.1} parent=1 // pred_check_branch
      %28 = sbr.rel (0) target = $region25
    $region24: #{tpu_custom_call.1} parent=1 // pred_region
      _
    $region25: #{tpu_custom_call.1} parent=1 // pred_fallthru
      _
    // Predicated region
    $region26: #{tpu_custom_call.1} parent=1 // pred_check
      _
    $region27: #{tpu_custom_call.1} parent=1 // pred_check_branch
      %30 = sbr.rel (0) target = $region29
    $region28: #{tpu_custom_call.1} parent=1 // pred_region
      _
    $region29: #{tpu_custom_call.1} parent=1 // pred_fallthru
      _
    // Predicated region
    $region30: #{tpu_custom_call.1} parent=1 // pred_check
      _
    $region31: #{tpu_custom_call.1} parent=1 // pred_check_branch
      %32 = sbr.rel (0) target = $region33
    $region32: #{tpu_custom_call.1} parent=1 // pred_region
      _
    $region33: #{tpu_custom_call.1} parent=1 // pred_fallthru
      _
    // Predicated region
    $region34: #{tpu_custom_call.1} parent=1 // pred_check
      _
    $region35: #{tpu_custom_call.1} parent=1 // pred_check_branch
      %34 = sbr.rel (0) target = $region37
    $region36: #{tpu_custom_call.1} parent=1 // pred_region
      _
    $region37: #{tpu_custom_call.1} parent=1 // pred_fallthru
      _
    // Predicated region
    $region38: #{tpu_custom_call.1} parent=1 // pred_check
      _
    $region39: #{tpu_custom_call.1} parent=1 // pred_check_branch
      %36 = sbr.rel (0) target = $region41
    $region40: #{tpu_custom_call.1} parent=1 // pred_region
      _
    $region41: #{tpu_custom_call.1} parent=1 // pred_fallthru
      _
    // Predicated region
    $region42: #{tpu_custom_call.1} parent=1 // pred_check
      _
    $region43: #{tpu_custom_call.1} parent=1 // pred_check_branch
      %38 = sbr.rel (0) target = $region45
    $region44: #{tpu_custom_call.1} parent=1 // pred_region
      _
    $region45: #{tpu_custom_call.1} parent=1 // pred_fallthru
      _
    %v40 = vld [vmem:[%s0] sm:$0xf]
    %v41 = vld [vmem:[%s1] sm:$0xf]
    %v42 = vld [vmem:[%s1 + $0x4] sm:$0xf]
    %v43 = vld [vmem:[%s1 + $0x8] sm:$0xf]
    %v44 = vld [vmem:[%s1 + $0xc] sm:$0xf]
    %v45 = vld [vmem:[%s6] sm:$0x1]
    %v47 = vlaneseq
    %v48 = vshrl.u32 %v47, 7
    %v49 = vsub.s32 0, %v48
    %v50 = vrot.slane %v45, %v49
    %v56 = vunpack.c.l.b16 %v41
    %v57 = vunpack.c.l.b16 %v42
    %v58 = vunpack.c.l.b16 %v43
    %v59 = vunpack.c.l.b16 %v44
    %v60 = vpack.c.b16 %v57, %v56
    %v61 = vpack.c.b16 %v59, %v58
    %vm64 = vcmask 261120
    %v66 = vsel %vm64, %v40, 0
    %68 = vmatprep.subr.bf16.mxu0 0
    %69 = vmatpush1.bf16.msra.mxu0 %v60
    %70 = vmatprep.subr.bf16.mxu0 0
    %71 = vmatpush1.bf16.msra.mxu0 %v61
    %72 = vmatprep.subr.bf16.mxu0 0
    %73 = vmatpush1.bf16.msra.mxu0 0
    %74 = vmatprep.subr.bf16.mxu0 0
    %75 = vmatpush1.bf16.msra.mxu0 0
    %76 = vmatprep.subr.bf16.mxu0 0
    %77 = vmatpush1.bf16.msra.mxu0 0
    %78 = vmatprep.subr.bf16.mxu0 0
    %79 = vmatpush1.bf16.msra.mxu0 0
    %80 = vmatprep.subr.bf16.mxu0 0
    %81 = vmatpush1.bf16.msra.mxu0 0
    %82 = vmatprep.subr.bf16.mxu0 0
    %83 = vmatpush1.bf16.msra.mxu0 0
    %84 = vmatprep.subr.bf16.mxu0 0
    %85 = vmatpush1.bf16.msra.mxu0 0
    %86 = vmatprep.subr.bf16.mxu0 0
    %87 = vmatpush1.bf16.msra.mxu0 0
    %88 = vmatprep.subr.bf16.mxu0 0
    %89 = vmatpush1.bf16.msra.mxu0 0
    %90 = vmatprep.subr.bf16.mxu0 0
    %91 = vmatpush1.bf16.msra.mxu0 0
    %92 = vmatprep.subr.bf16.mxu0 0
    %93 = vmatpush1.bf16.msra.mxu0 0
    %94 = vmatprep.subr.bf16.mxu0 0
    %95 = vmatpush1.bf16.msra.mxu0 0
    %96 = vmatprep.subr.bf16.mxu0 0
    %97 = vmatpush1.bf16.msra.mxu0 0
    %98 = vmatprep.subr.bf16.mxu0 0
    %99 = vmatpush1.bf16.msra.mxu0 0
    %100 = vmatprep.mubr.bf16.mxu0 0
    %101 = vmatmul.mubr.bf16.gmra.mrb[0].mxu0 %v66
    %v102 = vpop.f32.mrb[0].mxu0
    %v103 = vadd.f32 %v50, %v102
    %v104 = vpop.f32.mrb[0].mxu0
    %v105 = vpop.f32.mrb[0].mxu0
    %v106 = vpop.f32.mrb[0].mxu0
    %107 = vdwg.mxu0
    %v108 = vmax.f32 %v103, 0.0
    %v109 = vpack.c.bf16 %v108, %v108
    %v110 = vld [vmem:[%s2] sm:$0xf]
    %v111 = vld [vmem:[%s2 + $0x4] sm:$0xf]
    %v112 = vld [vmem:[%s2 + $0x8] sm:$0xf]
    %v113 = vld [vmem:[%s2 + $0xc] sm:$0xf]
    %v114 = vld [vmem:[%s2 + $0x10] sm:$0xf]
    %v115 = vld [vmem:[%s2 + $0x14] sm:$0xf]
    %v116 = vld [vmem:[%s2 + $0x18] sm:$0xf]
    %v117 = vld [vmem:[%s2 + $0x1c] sm:$0xf]
    %v118 = vld [vmem:[%s7] sm:$0x1]
    %v120 = vlaneseq
    %v121 = vshrl.u32 %v120, 7
    %v122 = vsub.s32 0, %v121
    %v123 = vrot.slane %v118, %v122
    %v133 = vunpack.c.l.b16 %v110
    %v134 = vunpack.c.l.b16 %v111
    %v135 = vunpack.c.l.b16 %v112
    %v136 = vunpack.c.l.b16 %v113
    %v137 = vunpack.c.l.b16 %v114
    %v138 = vunpack.c.l.b16 %v115
    %v139 = vunpack.c.l.b16 %v116
    %v140 = vunpack.c.l.b16 %v117
    %v141 = vpack.c.b16 %v134, %v133
    %v142 = vpack.c.b16 %v136, %v135
    %v143 = vpack.c.b16 %v138, %v137
    %v144 = vpack.c.b16 %v140, %v139
    %vm149 = vcmask 523264
    %v151 = vsel %vm149, %v109, 0
    %153 = vmatprep.subr.bf16.mxu0 0
    %154 = vmatpush1.bf16.msra.mxu0 %v141
    %155 = vmatprep.subr.bf16.mxu0 0
    %156 = vmatpush1.bf16.msra.mxu0 %v142
    %157 = vmatprep.subr.bf16.mxu0 0
    %158 = vmatpush1.bf16.msra.mxu0 %v143
    %159 = vmatprep.subr.bf16.mxu0 0
    %160 = vmatpush1.bf16.msra.mxu0 %v144
    %161 = vmatprep.subr.bf16.mxu0 0
    %162 = vmatpush1.bf16.msra.mxu0 0
    %163 = vmatprep.subr.bf16.mxu0 0
    %164 = vmatpush1.bf16.msra.mxu0 0
    %165 = vmatprep.subr.bf16.mxu0 0
    %166 = vmatpush1.bf16.msra.mxu0 0
    %167 = vmatprep.subr.bf16.mxu0 0
    %168 = vmatpush1.bf16.msra.mxu0 0
    %169 = vmatprep.subr.bf16.mxu0 0
    %170 = vmatpush1.bf16.msra.mxu0 0
    %171 = vmatprep.subr.bf16.mxu0 0
    %172 = vmatpush1.bf16.msra.mxu0 0
    %173 = vmatprep.subr.bf16.mxu0 0
    %174 = vmatpush1.bf16.msra.mxu0 0
    %175 = vmatprep.subr.bf16.mxu0 0
    %176 = vmatpush1.bf16.msra.mxu0 0
    %177 = vmatprep.subr.bf16.mxu0 0
    %178 = vmatpush1.bf16.msra.mxu0 0
    %179 = vmatprep.subr.bf16.mxu0 0
    %180 = vmatpush1.bf16.msra.mxu0 0
    %181 = vmatprep.subr.bf16.mxu0 0
    %182 = vmatpush1.bf16.msra.mxu0 0
    %183 = vmatprep.subr.bf16.mxu0 0
    %184 = vmatpush1.bf16.msra.mxu0 0
    %185 = vmatprep.mubr.bf16.mxu0 0
    %186 = vmatmul.mubr.bf16.gmra.mrb[0].mxu0 %v151
    %v187 = vpop.f32.mrb[0].mxu0
    %v188 = vadd.f32 %v123, %v187
    %v189 = vpop.f32.mrb[0].mxu0
    %v190 = vpop.f32.mrb[0].mxu0
    %v191 = vpop.f32.mrb[0].mxu0
    %192 = vdwg.mxu0
    %v193 = vmax.f32 %v188, 0.0
    %v194 = vpack.c.bf16 %v193, %v193
    %v195 = vld [vmem:[%s3] sm:$0xf]
    %v196 = vld [vmem:[%s3 + $0x4] sm:$0xf]
    %v197 = vld [vmem:[%s3 + $0x8] sm:$0xf]
    %v198 = vld [vmem:[%s3 + $0xc] sm:$0xf]
    %v199 = vld [vmem:[%s3 + $0x10] sm:$0xf]
    %v200 = vld [vmem:[%s3 + $0x14] sm:$0xf]
    %v201 = vld [vmem:[%s3 + $0x18] sm:$0xf]
    %v202 = vld [vmem:[%s3 + $0x1c] sm:$0xf]
    %v203 = vld [vmem:[%s8] sm:$0x1]
    %v205 = vlaneseq
    %v206 = vshrl.u32 %v205, 7
    %v207 = vsub.s32 0, %v206
    %v208 = vrot.slane %v203, %v207
    %v218 = vunpack.c.l.b16 %v195
    %v219 = vunpack.c.l.b16 %v196
    %v220 = vunpack.c.l.b16 %v197
    %v221 = vunpack.c.l.b16 %v198
    %v222 = vunpack.c.l.b16 %v199
    %v223 = vunpack.c.l.b16 %v200
    %v224 = vunpack.c.l.b16 %v201
    %v225 = vunpack.c.l.b16 %v202
    %v226 = vpack.c.b16 %v219, %v218
    %v227 = vpack.c.b16 %v221, %v220
    %v228 = vpack.c.b16 %v223, %v222
    %v229 = vpack.c.b16 %v225, %v224
    %v235 = vsel %vm149, %v194, 0
    %237 = vmatprep.subr.bf16.mxu0 0
    %238 = vmatpush1.bf16.msra.mxu0 %v226
    %239 = vmatprep.subr.bf16.mxu0 0
    %240 = vmatpush1.bf16.msra.mxu0 %v227
    %241 = vmatprep.subr.bf16.mxu0 0
    %242 = vmatpush1.bf16.msra.mxu0 %v228
    %243 = vmatprep.subr.bf16.mxu0 0
    %244 = vmatpush1.bf16.msra.mxu0 %v229
    %245 = vmatprep.subr.bf16.mxu0 0
    %246 = vmatpush1.bf16.msra.mxu0 0
    %247 = vmatprep.subr.bf16.mxu0 0
    %248 = vmatpush1.bf16.msra.mxu0 0
    %249 = vmatprep.subr.bf16.mxu0 0
    %250 = vmatpush1.bf16.msra.mxu0 0
    %251 = vmatprep.subr.bf16.mxu0 0
    %252 = vmatpush1.bf16.msra.mxu0 0
    %253 = vmatprep.subr.bf16.mxu0 0
    %254 = vmatpush1.bf16.msra.mxu0 0
    %255 = vmatprep.subr.bf16.mxu0 0
    %256 = vmatpush1.bf16.msra.mxu0 0
    %257 = vmatprep.subr.bf16.mxu0 0
    %258 = vmatpush1.bf16.msra.mxu0 0
    %259 = vmatprep.subr.bf16.mxu0 0
    %260 = vmatpush1.bf16.msra.mxu0 0
    %261 = vmatprep.subr.bf16.mxu0 0
    %262 = vmatpush1.bf16.msra.mxu0 0
    %263 = vmatprep.subr.bf16.mxu0 0
    %264 = vmatpush1.bf16.msra.mxu0 0
    %265 = vmatprep.subr.bf16.mxu0 0
    %266 = vmatpush1.bf16.msra.mxu0 0
    %267 = vmatprep.subr.bf16.mxu0 0
    %268 = vmatpush1.bf16.msra.mxu0 0
    %269 = vmatprep.mubr.bf16.mxu0 0
    %270 = vmatmul.mubr.bf16.gmra.mrb[0].mxu0 %v235
    %v271 = vpop.f32.mrb[0].mxu0
    %v272 = vadd.f32 %v208, %v271
    %v273 = vpop.f32.mrb[0].mxu0
    %v274 = vpop.f32.mrb[0].mxu0
    %v275 = vpop.f32.mrb[0].mxu0
    %276 = vdwg.mxu0
    %v277 = vmax.f32 %v272, 0.0
    %v278 = vpack.c.bf16 %v277, %v277
    %v279 = vld [vmem:[%s4] sm:$0xf]
    %v280 = vld [vmem:[%s4 + $0x4] sm:$0xf]
    %v281 = vld [vmem:[%s4 + $0x8] sm:$0xf]
    %v282 = vld [vmem:[%s4 + $0xc] sm:$0xf]
    %v283 = vld [vmem:[%s9] sm:$0x1]
    %v285 = vlaneseq
    %v286 = vshrl.u32 %v285, 7
    %v287 = vsub.s32 0, %v286
    %v288 = vrot.slane %v283, %v287
    %v294 = vunpack.c.l.b16 %v279
    %v295 = vunpack.c.l.b16 %v280
    %v296 = vunpack.c.l.b16 %v281
    %v297 = vunpack.c.l.b16 %v282
    %v298 = vpack.c.b16 %v295, %v294
    %v299 = vpack.c.b16 %v297, %v296
    %v303 = vsel %vm64, %v278, 0
    %305 = vmatprep.subr.bf16.mxu0 0
    %306 = vmatpush1.bf16.msra.mxu0 %v298
    %307 = vmatprep.subr.bf16.mxu0 0
    %308 = vmatpush1.bf16.msra.mxu0 %v299
    %309 = vmatprep.subr.bf16.mxu0 0
    %310 = vmatpush1.bf16.msra.mxu0 0
    %311 = vmatprep.subr.bf16.mxu0 0
    %312 = vmatpush1.bf16.msra.mxu0 0
    %313 = vmatprep.subr.bf16.mxu0 0
    %314 = vmatpush1.bf16.msra.mxu0 0
    %315 = vmatprep.subr.bf16.mxu0 0
    %316 = vmatpush1.bf16.msra.mxu0 0
    %317 = vmatprep.subr.bf16.mxu0 0
    %318 = vmatpush1.bf16.msra.mxu0 0
    %319 = vmatprep.subr.bf16.mxu0 0
    %320 = vmatpush1.bf16.msra.mxu0 0
    %321 = vmatprep.subr.bf16.mxu0 0
    %322 = vmatpush1.bf16.msra.mxu0 0
    %323 = vmatprep.subr.bf16.mxu0 0
    %324 = vmatpush1.bf16.msra.mxu0 0
    %325 = vmatprep.subr.bf16.mxu0 0
    %326 = vmatpush1.bf16.msra.mxu0 0
    %327 = vmatprep.subr.bf16.mxu0 0
    %328 = vmatpush1.bf16.msra.mxu0 0
    %329 = vmatprep.subr.bf16.mxu0 0
    %330 = vmatpush1.bf16.msra.mxu0 0
    %331 = vmatprep.subr.bf16.mxu0 0
    %332 = vmatpush1.bf16.msra.mxu0 0
    %333 = vmatprep.subr.bf16.mxu0 0
    %334 = vmatpush1.bf16.msra.mxu0 0
    %335 = vmatprep.subr.bf16.mxu0 0
    %336 = vmatpush1.bf16.msra.mxu0 0
    %337 = vmatprep.mubr.bf16.mxu0 0
    %338 = vmatmul.mubr.bf16.gmra.mrb[0].mxu0 %v303
    %v339 = vpop.f32.mrb[0].mxu0
    %v340 = vadd.f32 %v288, %v339
    %v341 = vpop.f32.mrb[0].mxu0
    %v342 = vpop.f32.mrb[0].mxu0
    %v343 = vpop.f32.mrb[0].mxu0
    %344 = vdwg.mxu0
    %v345 = vmax.f32 %v340, 0.0
    %v346 = vpack.c.bf16 %v345, %v345
    %v347 = vld [vmem:[%s5] sm:$0xf]
    %v348 = vld [vmem:[%s5 + $0x4] sm:$0xf]
    %v349 = vld [vmem:[%s10] sm:$0x1]
    %v351 = vlaneseq
    %v352 = vshrl.u32 %v351, 7
    %v353 = vsub.s32 0, %v352
    %v354 = vrot.slane %v349, %v353
    %v358 = vunpack.c.l.b16 %v347
    %v359 = vunpack.c.l.b16 %v348
    %v360 = vpack.c.b16 %v359, %v358
    %vm362 = vcmask 130048
    %v364 = vsel %vm362, %v346, 0
    %366 = vmatprep.subr.bf16.mxu0 0
    %367 = vmatpush1.bf16.msra.mxu0 %v360
    %368 = vmatprep.subr.bf16.mxu0 0
    %369 = vmatpush1.bf16.msra.mxu0 0
    %370 = vmatprep.subr.bf16.mxu0 0
    %371 = vmatpush1.bf16.msra.mxu0 0
    %372 = vmatprep.subr.bf16.mxu0 0
    %373 = vmatpush1.bf16.msra.mxu0 0
    %374 = vmatprep.subr.bf16.mxu0 0
    %375 = vmatpush1.bf16.msra.mxu0 0
    %376 = vmatprep.subr.bf16.mxu0 0
    %377 = vmatpush1.bf16.msra.mxu0 0
    %378 = vmatprep.subr.bf16.mxu0 0
    %379 = vmatpush1.bf16.msra.mxu0 0
    %380 = vmatprep.subr.bf16.mxu0 0
    %381 = vmatpush1.bf16.msra.mxu0 0
    %382 = vmatprep.subr.bf16.mxu0 0
    %383 = vmatpush1.bf16.msra.mxu0 0
    %384 = vmatprep.subr.bf16.mxu0 0
    %385 = vmatpush1.bf16.msra.mxu0 0
    %386 = vmatprep.subr.bf16.mxu0 0
    %387 = vmatpush1.bf16.msra.mxu0 0
    %388 = vmatprep.subr.bf16.mxu0 0
    %389 = vmatpush1.bf16.msra.mxu0 0
    %390 = vmatprep.subr.bf16.mxu0 0
    %391 = vmatpush1.bf16.msra.mxu0 0
    %392 = vmatprep.subr.bf16.mxu0 0
    %393 = vmatpush1.bf16.msra.mxu0 0
    %394 = vmatprep.subr.bf16.mxu0 0
    %395 = vmatpush1.bf16.msra.mxu0 0
    %396 = vmatprep.subr.bf16.mxu0 0
    %397 = vmatpush1.bf16.msra.mxu0 0
    %398 = vmatprep.mubr.bf16.mxu0 0
    %399 = vmatmul.mubr.bf16.gmra.mrb[0].mxu0 %v364
    %v400 = vpop.f32.mrb[0].mxu0
    %v401 = vadd.f32 %v354, %v400
    %v402 = vpop.f32.mrb[0].mxu0
    %v403 = vpop.f32.mrb[0].mxu0
    %v404 = vpop.f32.mrb[0].mxu0
    %405 = vdwg.mxu0
    %v406 = vlaneseq
    %v407 = vand.u32 %v406, 127
    %vm408 = vcmp.eq.s32.totalorder %v407, 1
    %vm409 = vcmp.eq.s32.totalorder %v407, 4
    %vm410 = vmor %vm408, %vm409
    %v411 = vxor.u32 %v401, 2147483648
    %v412 = vmul.f32 %v411, 1.442695
    %v413 = vpow.pop %v412
    %v414 = vadd.f32 %v413, 1.0
    %v415 = vrcp.pop %v414
    %v416 = vmul.f32 1.0, %v415
    %v417 = vsel %vm410, %v416, %v401
    %418 = vxpose.xlu0.b32.start [1/16] %v417, 128
    %419 = vxpose.xlu0.b32.cont [2/16] 0.0, 128
    %420 = vxpose.xlu0.b32.cont [3/16] 0.0, 128
    %421 = vxpose.xlu0.b32.cont [4/16] 0.0, 128
    %422 = vxpose.xlu0.b32.cont [5/16] 0.0, 128
    %423 = vxpose.xlu0.b32.cont [6/16] 0.0, 128
    %424 = vxpose.xlu0.b32.cont [7/16] 0.0, 128
    %425 = vxpose.xlu0.b32.cont [8/16] 0.0, 128
    %426 = vxpose.xlu0.b32.cont [9/16] 0.0, 128
    %427 = vxpose.xlu0.b32.cont [10/16] 0.0, 128
    %428 = vxpose.xlu0.b32.cont [11/16] 0.0, 128
    %429 = vxpose.xlu0.b32.cont [12/16] 0.0, 128
    %430 = vxpose.xlu0.b32.cont [13/16] 0.0, 128
    %431 = vxpose.xlu0.b32.cont [14/16] 0.0, 128
    %432 = vxpose.xlu0.b32.cont [15/16] 0.0, 128
    %433 = vxpose.xlu0.b32.end [16/16] 0.0, 128
    %v434 = vpop.trf.xlu0
    %v435 = vpop.trf.xlu0
    %v436 = vpop.trf.xlu0
    %v437 = vpop.trf.xlu0
    %v438 = vpop.trf.xlu0
    %v439 = vpop.trf.xlu0
    %v440 = vpop.trf.xlu0
    %v441 = vpop.trf.xlu0
    %v442 = vpop.trf.xlu0
    %v443 = vpop.trf.xlu0
    %v444 = vpop.trf.xlu0
    %v445 = vpop.trf.xlu0
    %v446 = vpop.trf.xlu0
    %v447 = vpop.trf.xlu0
    %v448 = vpop.trf.xlu0
    %v449 = vpop.trf.xlu0
    %vm450 = vcmask 64512
    %451 = vst.msk [vmem:[#allocation2] sm:$0xff] %vm450, %v434
    // Predicated region
    $region46: #{tpu_custom_call.1} parent=1 // pred_check
      _
    $region47: #{tpu_custom_call.1} parent=1 // pred_check_branch
      %453 = sbr.rel (0) target = $region49
    $region48: #{tpu_custom_call.1} parent=1 // pred_region
      %s455 = ssub.s32 128, 128
      %456 = vsyncadd [#allocation3], %s455
      %s458 = sshll.u32 [#allocation2], 4
      %s459 = int_to_ptr.vmem [resolvable:$true] %s458
      %461 = dma.vmem_to_hbm [thread:$0]  %s459, 128, %s11, [#allocation3]
    $region49: #{tpu_custom_call.1} parent=1 // pred_fallthru
      _
    // Predicated region
    $region50: #{tpu_custom_call.1} parent=1 // pred_check
      _
    $region51: #{tpu_custom_call.1} parent=1 // pred_check_branch
      %463 = sbr.rel (0) target = $region53
    $region52: #{tpu_custom_call.1} parent=1 // pred_region
      %464 = dma.done [#allocation3], 128
    $region53: #{tpu_custom_call.1} parent=1 // pred_fallthru
      _
    %465 = vsyncpa [#allocation3], 1

</llo_original>
